<compile_context>
chip_gen: v7x
topology: tpu7x:2x2x1
jax: 0.10.0
libtpu: 0.0.40
codegen_flags: <defaults>
</compile_context>

<pallas_src>
import functools
import math

import jax
import jax.numpy as jnp
from jax.experimental import pallas as pl
from jax.experimental.pallas import tpu as pltpu


def _rot_lanes_left(y, s):
    # result[:, i] = y[:, (i + s) % W].  Direction is defined by construction
    # (concatenate of two contiguous lane slices), so no dependence on the
    # hardware rotate convention.
    return jnp.concatenate([y[:, s:], y[:, :s]], axis=1)


def _maxpool_packed_kernel(x_ref, o_ref, *, seg: int, nseg: int):
    """x_ref: (TRb, 128); each row holds `nseg` groups of `seg` lanes.

    o_ref: (TRb, nseg); o[r, j] = max over x[r, seg*j : seg*(j+1)].
    All ops are per-row (no cross-row mixing), so ragged last blocks are safe.
    """
    y = x_ref[...]

    # 1) Segmented max tree: after shifts seg/2, seg/4, ..., 1, lane seg*j holds
    #    the max of group j (its dependency chain stays inside the group, so the
    #    cyclic wrap of the rotate never pollutes it).
    s = seg // 2
    while s >= 1:
        y = jnp.maximum(y, _rot_lanes_left(y, s))
        s //= 2

    # 2) Compact group maxima from lanes {0, seg, 2*seg, ...} to lanes
    #    {0, 1, ..., nseg-1}.  Stage with step=2**k moves the values whose bit k
    #    of the group index is set left by (seg-1)*2**k; all destination lanes
    #    are garbage lanes at that point, so a masked select is safe.
    if nseg > 1:
        lane = jax.lax.broadcasted_iota(jnp.int32, (1, y.shape[-1]), 1)
        step = 1
        while step < nseg:
            dist = (seg - 1) * step
            period = 2 * seg * step          # power of two
            m = lane & (period - 1)
            mask = (m >= step) & (m < 2 * step)
            y = jnp.where(mask, _rot_lanes_left(y, dist), y)
            step *= 2

    o_ref[...] = y[:, :nseg].astype(o_ref.dtype)


def maxpool_last_dim(x: jax.Array, *, block_rows: int = 4096,
                     min_pallas_bytes: int = 512 * 1024,
                     force_pallas: bool = False) -> jax.Array:
    """Equivalent of torch's x.max(dim=-1, keepdim=False)[0]."""
    lead = x.shape[:-1]
    L = x.shape[-1]
    R = math.prod(lead) if lead else 1
    itemsize = jnp.dtype(x.dtype).itemsize

    packable = (L >= 2 and 128 % L == 0 and itemsize == 4
                and (R * L) % 128 == 0)
    tiny = x.size * itemsize < min_pallas_bytes

    if not packable or (tiny and not force_pallas):
        # TODO(synk): add a generic (un-packed) Pallas path for last dims that do
        # not divide 128 / sub-32-bit dtypes; tiny inputs are faster via XLA.
        return jnp.max(x, axis=-1)

    P = 128 // L                 # original rows packed per 128-lane row
    Rp = R // P                  # packed rows
    xp = x.reshape(Rp, 128)      # free view of the contiguous row-major buffer

    # Row tile: multiple of 8 sublanes; ~2 MiB/step amortizes the ~0.35 us
    # per-grid-step overhead on v5e/v6e/v7x.  (v7x with its faster HBM may
    # prefer block_rows=8192; keep num_tiles >= 2 there for both TensorCores.)
    if Rp <= 8:
        trb = Rp                                  # single full block
    else:
        trb = min(block_rows, (Rp // 8) * 8)
    grid = (pl.cdiv(Rp, trb),)

    out2d = pl.pallas_call(
        functools.partial(_maxpool_packed_kernel, seg=L, nseg=P),
        out_shape=jax.ShapeDtypeStruct((Rp, P), x.dtype),
        grid_spec=pl.GridSpec(
            grid=grid,
            in_specs=[pl.BlockSpec((trb, 128), lambda i: (i, 0))],
            out_specs=pl.BlockSpec((trb, P), lambda i: (i, 0)),
        ),
        compiler_params=pltpu.CompilerParams(
            dimension_semantics=("parallel",),
            vmem_limit_bytes=32 * 1024 * 1024,
        ),
    )(xp)

    return out2d.reshape(lead)


if __name__ == "__main__":
    key = jax.random.PRNGKey(0)

    # Shape implied by the module's forward (NCHW-ish): (2, 4, 16, 16).
    x = jax.random.normal(key, (2, 4, 16, 16), dtype=jnp.float32)

    # Default entry point: tiny input dispatches to the fused XLA reduce.
    out_auto = maxpool_last_dim(x)
    # Also force the Pallas kernel at the module's shape.
    out_pallas = maxpool_last_dim(x, force_pallas=True)
    jax.block_until_ready((out_auto, out_pallas))

    ref = jnp.max(x, axis=-1)
    assert out_auto.shape == ref.shape and out_pallas.shape == ref.shape
    assert jnp.allclose(out_auto, ref), "mismatch (XLA dispatch path)"
    assert jnp.allclose(out_pallas, ref), "mismatch (Pallas path, small case)"

    # Moderate case exercising the auto-Pallas path, a multi-step grid and a
    # ragged final row tile (Rp = 2180 packed rows -> blocks of 2176 + 4).
    x2 = jax.random.normal(jax.random.PRNGKey(1), (2, 4, 2180, 16),
                           dtype=jnp.float32)
    out2 = maxpool_last_dim(x2)
    jax.block_until_ready(out2)
    ref2 = jnp.max(x2, axis=-1)
    assert out2.shape == ref2.shape, (out2.shape, ref2.shape)
    assert jnp.allclose(out2, ref2), "mismatch (tiled Pallas path)"

    print("KERNEL_OK")
</pallas_src>

<mosaic_0001>
module attributes {stable_mosaic.version = 11 : i64} {
  func.func @_maxpool_packed_kernel(%arg0: i32, %arg1: memref<16x128xf32, #tpu.memory_space<vmem>>, %arg2: memref<16x8xf32, #tpu.memory_space<vmem>>) attributes {dimension_semantics = [#tpu.dimension_semantics<parallel>], iteration_bounds = array<i64: 1>, scalar_prefetch = 0 : i64, scratch_operands = 0 : i64, tpu.core_type = #tpu.core_type<tc>, window_params = [{transform_indices = @transform_0, window_bounds = array<i64: 16, 128>}, {transform_indices = @transform_1, window_bounds = array<i64: 16, 8>}]} {
    %c0 = arith.constant 0 : index
    %c0_0 = arith.constant 0 : index
    %0 = vector.load %arg1[%c0, %c0_0] : memref<16x128xf32, #tpu.memory_space<vmem>>, vector<16x128xf32>
    %1 = vector.extract_strided_slice %0 {offsets = [0, 8], sizes = [16, 120], strides = [1, 1]} : vector<16x128xf32> to vector<16x120xf32>
    %2 = vector.extract_strided_slice %0 {offsets = [0, 0], sizes = [16, 8], strides = [1, 1]} : vector<16x128xf32> to vector<16x8xf32>
    %3 = tpu.concatenate %1, %2 in 1 : vector<16x120xf32>, vector<16x8xf32> -> vector<16x128xf32>
    %4 = arith.maximumf %0, %3 : vector<16x128xf32>
    %5 = vector.extract_strided_slice %4 {offsets = [0, 4], sizes = [16, 124], strides = [1, 1]} : vector<16x128xf32> to vector<16x124xf32>
    %6 = vector.extract_strided_slice %4 {offsets = [0, 0], sizes = [16, 4], strides = [1, 1]} : vector<16x128xf32> to vector<16x4xf32>
    %7 = tpu.concatenate %5, %6 in 1 : vector<16x124xf32>, vector<16x4xf32> -> vector<16x128xf32>
    %8 = arith.maximumf %4, %7 : vector<16x128xf32>
    %9 = vector.extract_strided_slice %8 {offsets = [0, 2], sizes = [16, 126], strides = [1, 1]} : vector<16x128xf32> to vector<16x126xf32>
    %10 = vector.extract_strided_slice %8 {offsets = [0, 0], sizes = [16, 2], strides = [1, 1]} : vector<16x128xf32> to vector<16x2xf32>
    %11 = tpu.concatenate %9, %10 in 1 : vector<16x126xf32>, vector<16x2xf32> -> vector<16x128xf32>
    %12 = arith.maximumf %8, %11 : vector<16x128xf32>
    %13 = vector.extract_strided_slice %12 {offsets = [0, 1], sizes = [16, 127], strides = [1, 1]} : vector<16x128xf32> to vector<16x127xf32>
    %14 = vector.extract_strided_slice %12 {offsets = [0, 0], sizes = [16, 1], strides = [1, 1]} : vector<16x128xf32> to vector<16x1xf32>
    %15 = tpu.concatenate %13, %14 in 1 : vector<16x127xf32>, vector<16x1xf32> -> vector<16x128xf32>
    %16 = arith.maximumf %12, %15 : vector<16x128xf32>
    %17 = tpu.iota {dimensions = array<i32: 1>} : vector<1x128xi32>
    %c31_i32 = arith.constant 31 : i32
    %18 = vector.broadcast %c31_i32 : i32 to vector<1x128xi32>
    %19 = arith.andi %17, %18 : vector<1x128xi32>
    %c1_i32 = arith.constant 1 : i32
    %20 = vector.broadcast %c1_i32 : i32 to vector<1x128xi32>
    %21 = arith.cmpi sge, %19, %20 : vector<1x128xi32>
    %c2_i32 = arith.constant 2 : i32
    %22 = vector.broadcast %c2_i32 : i32 to vector<1x128xi32>
    %23 = arith.cmpi slt, %19, %22 : vector<1x128xi32>
    %24 = arith.andi %21, %23 : vector<1x128xi1>
    %25 = vector.extract_strided_slice %16 {offsets = [0, 15], sizes = [16, 113], strides = [1, 1]} : vector<16x128xf32> to vector<16x113xf32>
    %26 = vector.extract_strided_slice %16 {offsets = [0, 0], sizes = [16, 15], strides = [1, 1]} : vector<16x128xf32> to vector<16x15xf32>
    %27 = tpu.concatenate %25, %26 in 1 : vector<16x113xf32>, vector<16x15xf32> -> vector<16x128xf32>
    %28 = vector.shape_cast %24 : vector<1x128xi1> to vector<1x128xi1>
    %29 = vector.broadcast %28 : vector<1x128xi1> to vector<16x128xi1>
    %30 = arith.select %29, %27, %16 : vector<16x128xi1>, vector<16x128xf32>
    %c63_i32 = arith.constant 63 : i32
    %31 = vector.broadcast %c63_i32 : i32 to vector<1x128xi32>
    %32 = arith.andi %17, %31 : vector<1x128xi32>
    %c2_i32_1 = arith.constant 2 : i32
    %33 = vector.broadcast %c2_i32_1 : i32 to vector<1x128xi32>
    %34 = arith.cmpi sge, %32, %33 : vector<1x128xi32>
    %c4_i32 = arith.constant 4 : i32
    %35 = vector.broadcast %c4_i32 : i32 to vector<1x128xi32>
    %36 = arith.cmpi slt, %32, %35 : vector<1x128xi32>
    %37 = arith.andi %34, %36 : vector<1x128xi1>
    %38 = vector.extract_strided_slice %30 {offsets = [0, 30], sizes = [16, 98], strides = [1, 1]} : vector<16x128xf32> to vector<16x98xf32>
    %39 = vector.extract_strided_slice %30 {offsets = [0, 0], sizes = [16, 30], strides = [1, 1]} : vector<16x128xf32> to vector<16x30xf32>
    %40 = tpu.concatenate %38, %39 in 1 : vector<16x98xf32>, vector<16x30xf32> -> vector<16x128xf32>
    %41 = vector.shape_cast %37 : vector<1x128xi1> to vector<1x128xi1>
    %42 = vector.broadcast %41 : vector<1x128xi1> to vector<16x128xi1>
    %43 = arith.select %42, %40, %30 : vector<16x128xi1>, vector<16x128xf32>
    %c127_i32 = arith.constant 127 : i32
    %44 = vector.broadcast %c127_i32 : i32 to vector<1x128xi32>
    %45 = arith.andi %17, %44 : vector<1x128xi32>
    %c4_i32_2 = arith.constant 4 : i32
    %46 = vector.broadcast %c4_i32_2 : i32 to vector<1x128xi32>
    %47 = arith.cmpi sge, %45, %46 : vector<1x128xi32>
    %c8_i32 = arith.constant 8 : i32
    %48 = vector.broadcast %c8_i32 : i32 to vector<1x128xi32>
    %49 = arith.cmpi slt, %45, %48 : vector<1x128xi32>
    %50 = arith.andi %47, %49 : vector<1x128xi1>
    %51 = vector.extract_strided_slice %43 {offsets = [0, 60], sizes = [16, 68], strides = [1, 1]} : vector<16x128xf32> to vector<16x68xf32>
    %52 = vector.extract_strided_slice %43 {offsets = [0, 0], sizes = [16, 60], strides = [1, 1]} : vector<16x128xf32> to vector<16x60xf32>
    %53 = tpu.concatenate %51, %52 in 1 : vector<16x68xf32>, vector<16x60xf32> -> vector<16x128xf32>
    %54 = vector.shape_cast %50 : vector<1x128xi1> to vector<1x128xi1>
    %55 = vector.broadcast %54 : vector<1x128xi1> to vector<16x128xi1>
    %56 = arith.select %55, %53, %43 : vector<16x128xi1>, vector<16x128xf32>
    %57 = vector.extract_strided_slice %56 {offsets = [0, 0], sizes = [16, 8], strides = [1, 1]} : vector<16x128xf32> to vector<16x8xf32>
    %c0_3 = arith.constant 0 : index
    %c0_4 = arith.constant 0 : index
    %58 = vector.load %arg2[%c0_3, %c0_4] : memref<16x8xf32, #tpu.memory_space<vmem>>, vector<16x8xf32>
    tpu.vector_store %arg2[%c0_3, %c0_4], %57 {strides = array<i32>} : memref<16x8xf32, #tpu.memory_space<vmem>>, vector<16x8xf32>,
    return
  }
  func.func @transform_0(%arg0: i32) -> (i32, i32) {
    %c0_i32 = arith.constant 0 : i32
    %c0_i32_0 = arith.constant 0 : i32
    return %arg0, %c0_i32 : i32, i32
  }
  func.func @transform_1(%arg0: i32) -> (i32, i32) {
    %c0_i32 = arith.constant 0 : i32
    %c0_i32_0 = arith.constant 0 : i32
    return %arg0, %c0_i32 : i32, i32
  }
}

</mosaic_0001>

<llo_original>
// kernel: tpu_custom_call.1
$region0: #{tpu_custom_call.1}
  #allocation0 [shape = 'u32[]', space=smem, size = 0x4, offset = 0x4, fixed_abs, tag = 'smem constant byte address 0x4 - core index']
  #allocation1 [shape = 'u32[144,128]{1,0:T(1,128)}', space=vmem, size = 0x12000, scoped, tag = 'internal scratch']
  %s0 = inlined_call_operand.hbm [shape: f32[16,128], index: 0, kind: input, shape index: {}]
  %s1 = inlined_call_operand.vmem [shape: f32[16,8], index: 1, kind: output, shape index: {}]
  %s2 = sld [smem:[#allocation0]]
  $region18: #{tpu_custom_call.1} parent=0
    _
  %s4 = ssub.s32 1, %s2
  %s5 = scalar_select 0, %s4, %s2
  $region1: #{tpu_custom_call.1} parent=0
    #allocation2 [shape = 'u8[8192]{0}', space=vmem, size = 0x2000, scoped, tag = 'input window, operand 0, single buffered']
    #allocation3 [shape = 's32[1]{0}', space=sflag, size = 0x4, scoped, tag = 'scoped memory for tpu_custom_call.1']
    %6 = vsyncpa [#allocation3], 0
    // Predicated region
    $region2: #{tpu_custom_call.1} parent=1 // pred_check
      _
    $region3: #{tpu_custom_call.1} parent=1 // pred_check_branch
      %8 = sbr.rel (0) target = $region5
    $region4: #{tpu_custom_call.1} parent=1 // pred_region
      %s10 = ssub.s32 256, 256
      %11 = vsyncadd [#allocation3], %s10
      %s12 = sshll.u32 [#allocation2], 4
      %s13 = int_to_ptr.vmem [resolvable:$true] %s12
      %18 = dma.hbm_to_vmem [thread:$0]  %s0, 256, %s13, [#allocation3], 128, 128, 8
    $region5: #{tpu_custom_call.1} parent=1 // pred_fallthru
      _
    // Predicated region
    $region6: #{tpu_custom_call.1} parent=1 // pred_check
      _
    $region7: #{tpu_custom_call.1} parent=1 // pred_check_branch
      %20 = sbr.rel (0) target = $region9
    $region8: #{tpu_custom_call.1} parent=1 // pred_region
      %21 = dma.done [#allocation3], 256
    $region9: #{tpu_custom_call.1} parent=1 // pred_fallthru
      _
    %v22 = vld [vmem:[#allocation2] sm:$0xff]
    %v23 = vld [vmem:[#allocation2 + $0x8] sm:$0xff]
    %26 = vrot.lane.b32.xlu0 %v22, 120
    %v27 = vpop.permute.xlu0 %26
    %28 = vrot.lane.b32.xlu0 %v23, 120
    %v29 = vpop.permute.xlu0 %28
    %v32 = vmax.f32 %v22, %v27
    %v33 = vmax.f32 %v23, %v29
    %36 = vrot.lane.b32.xlu0 %v32, 124
    %v37 = vpop.permute.xlu0 %36
    %38 = vrot.lane.b32.xlu0 %v33, 124
    %v39 = vpop.permute.xlu0 %38
    %v42 = vmax.f32 %v32, %v37
    %v43 = vmax.f32 %v33, %v39
    %46 = vrot.lane.b32.xlu0 %v42, 126
    %v47 = vpop.permute.xlu0 %46
    %48 = vrot.lane.b32.xlu0 %v43, 126
    %v49 = vpop.permute.xlu0 %48
    %v52 = vmax.f32 %v42, %v47
    %v53 = vmax.f32 %v43, %v49
    %56 = vrot.lane.b32.xlu0 %v52, 127
    %v57 = vpop.permute.xlu0 %56
    %58 = vrot.lane.b32.xlu0 %v53, 127
    %v59 = vpop.permute.xlu0 %58
    %v62 = vmax.f32 %v52, %v57
    %v63 = vmax.f32 %v53, %v59
    %v64 = vlaneseq
    %v65 = vand.u32 %v64, 127
    %v66 = vand.u32 %v65, 31
    %vm67 = vcmp.ge.s32.totalorder %v66, 1
    %vm68 = vcmp.lt.s32.totalorder %v66, 2
    %vm69 = vmand %vm67, %vm68
    %72 = vrot.lane.b32.xlu0 %v62, 113
    %v73 = vpop.permute.xlu0 %72
    %74 = vrot.lane.b32.xlu0 %v63, 113
    %v75 = vpop.permute.xlu0 %74
    %v78 = vsel %vm69, 1, 0
    %vm79 = vcmp.eq.s32.totalorder %v78, 1
    %v80 = vsel %vm79, %v73, %v62
    %v81 = vsel %vm79, %v75, %v63
    %v82 = vand.u32 %v65, 63
    %vm83 = vcmp.ge.s32.totalorder %v82, 2
    %vm84 = vcmp.lt.s32.totalorder %v82, 4
    %vm85 = vmand %vm83, %vm84
    %88 = vrot.lane.b32.xlu0 %v80, 98
    %v89 = vpop.permute.xlu0 %88
    %90 = vrot.lane.b32.xlu0 %v81, 98
    %v91 = vpop.permute.xlu0 %90
    %v94 = vsel %vm85, 1, 0
    %vm95 = vcmp.eq.s32.totalorder %v94, 1
    %v96 = vsel %vm95, %v89, %v80
    %v97 = vsel %vm95, %v91, %v81
    %v98 = vand.u32 %v65, 127
    %vm99 = vcmp.ge.s32.totalorder %v98, 4
    %vm100 = vcmp.lt.s32.totalorder %v98, 8
    %vm101 = vmand %vm99, %vm100
    %104 = vrot.lane.b32.xlu0 %v96, 68
    %v105 = vpop.permute.xlu0 %104
    %106 = vrot.lane.b32.xlu0 %v97, 68
    %v107 = vpop.permute.xlu0 %106
    %v110 = vsel %vm101, 1, 0
    %vm111 = vcmp.eq.s32.totalorder %v110, 1
    %v112 = vsel %vm111, %v105, %v96
    %v113 = vsel %vm111, %v107, %v97
    %vm114 = vcmask 64512
    %115 = vst.msk [vmem:[%s1] sm:$0xff] %vm114, %v112
    %116 = vst.msk [vmem:[%s1 + $0x8] sm:$0xff] %vm114, %v113
    // Predicated region
    $region10: #{tpu_custom_call.1} parent=1 // pred_check
      _
    $region11: #{tpu_custom_call.1} parent=1 // pred_check_branch
      %118 = sbr.rel (0) target = $region13
    $region12: #{tpu_custom_call.1} parent=1 // pred_region
      _
    $region13: #{tpu_custom_call.1} parent=1 // pred_fallthru
      _
    // Predicated region
    $region14: #{tpu_custom_call.1} parent=1 // pred_check
      _
    $region15: #{tpu_custom_call.1} parent=1 // pred_check_branch
      %120 = sbr.rel (0) target = $region17
    $region16: #{tpu_custom_call.1} parent=1 // pred_region
      _
    $region17: #{tpu_custom_call.1} parent=1 // pred_fallthru
      _
    %121 = vsyncpa [#allocation3], 1

</llo_original>
